<compile_context>
chip_gen: v6e
topology: v6e:2x2x1
jax: 0.10.0
libtpu: 0.0.40
codegen_flags: <defaults>
</compile_context>

<pallas_src>
from functools import partial

import jax
import jax.numpy as jnp
from jax.experimental import pallas as pl
from jax.experimental.pallas import tpu as pltpu


def mlp_t_kernel(xT_ref, w1_ref, b1_ref, w2_ref, b2_ref, w3_ref, b3_ref, oT_ref):
    # xT: (in, bt) f32 -> bf16 in-kernel; weights already bf16; f32 accumulation.
    xT = xT_ref[...].astype(jnp.bfloat16)

    h1 = jnp.dot(w1_ref[...], xT, preferred_element_type=jnp.float32) + b1_ref[...]
    h1 = jnp.maximum(h1, 0.0).astype(jnp.bfloat16)                     # ReLU

    h2 = jnp.dot(w2_ref[...], h1, preferred_element_type=jnp.float32) + b2_ref[...]
    h2 = jnp.maximum(h2, 0.0).astype(jnp.bfloat16)                     # ReLU

    logits = jnp.dot(w3_ref[...], h2, preferred_element_type=jnp.float32) + b3_ref[...]
    oT_ref[...] = jax.nn.sigmoid(logits)                               # lane-dense f32 store


def _round_up(x, m):
    return ((x + m - 1) // m) * m


def _choose_batch_tile(batch):
    """Batch maps to the lane axis, so tiles must be a multiple of 128.

    Small/medium batches: a single grid step (a second step only adds ~0.35 us
    of overhead -- there is nothing to pipeline against constant weight
    blocks).  Large batches: ~4K lanes/step keeps per-step overhead around or
    below 10% while the double-buffered tiles stay well under VMEM.
    """
    single_step_max = 4096
    if batch <= single_step_max:
        return _round_up(batch, 128)
    return 4096


def _vmem_capacity_bytes():
    try:
        return int(pltpu.get_tpu_info().vmem_capacity_bytes)
    except Exception:
        return 64 << 20  # conservative fallback = v7x per-TC VMEM


@partial(jax.jit, static_argnames=("batch_tile",))
def content_enhancement_forward(x, kparams, *, batch_tile=None):
    """x: (B, input_dim) f32.  kparams: kernel-layout params from prepare_kernel_params."""
    B, input_dim = x.shape
    hidden_dim = kparams["w1"].shape[0]
    output_dim = kparams["w3"].shape[0]

    if batch_tile is None:
        batch_tile = _choose_batch_tile(B)
    batch_tile = _round_up(max(batch_tile, 128), 128)
    B_pad = _round_up(B, batch_tile)
    grid = (B_pad // batch_tile,)

    # Batch onto lanes; zero-pad ragged batches up to the tile.
    xT = x.T                                   # (input_dim, B), stays f32
    if B_pad != B:
        xT = jnp.pad(xT, ((0, 0), (0, B_pad - B)))

    w1, b1 = kparams["w1"], kparams["b1"]      # (H, in) bf16, (H, 1) f32
    w2, b2 = kparams["w2"], kparams["b2"]      # (H, H)  bf16, (H, 1) f32
    w3, b3 = kparams["w3"], kparams["b3"]      # (O, H)  bf16, (O, 1) f32

    # Batch (lane) axis tiled; weights/biases replicated (constant index_map).
    x_spec = pl.BlockSpec((input_dim, batch_tile), lambda i: (0, i))
    full = lambda shape: pl.BlockSpec(shape, lambda i: (0, 0))
    out_spec = pl.BlockSpec((output_dim, batch_tile), lambda i: (0, i))

    # Advisory cost + chip-aware VMEM budget.
    flops = 2 * B_pad * (input_dim * hidden_dim
                         + hidden_dim * hidden_dim
                         + hidden_dim * output_dim)
    bytes_accessed = (xT.size * 4 + B_pad * output_dim * 4
                      + (w1.size + w2.size + w3.size) * 2
                      + (b1.size + b2.size + b3.size) * 4)
    vmem_need = (2 * input_dim * batch_tile * 4        # f32 xT tiles, double-buffered
                 + 2 * output_dim * batch_tile * 4     # f32 out tiles, double-buffered
                 + 2 * (w1.size + w2.size + w3.size) * 2
                 + 2 * (b1.size + b2.size + b3.size) * 4
                 + 2 * hidden_dim * batch_tile * 4)    # in-kernel intermediates headroom
    vmem_cap = _vmem_capacity_bytes()
    vmem_limit = int(min(max(2 * vmem_need, 4 << 20), int(vmem_cap * 0.9)))

    oT = pl.pallas_call(
        mlp_t_kernel,
        out_shape=jax.ShapeDtypeStruct((output_dim, B_pad), jnp.float32),
        grid_spec=pltpu.PrefetchScalarGridSpec(
            num_scalar_prefetch=0,
            grid=grid,
            in_specs=[
                x_spec,
                full((hidden_dim, input_dim)),
                full((hidden_dim, 1)),
                full((hidden_dim, hidden_dim)),
                full((hidden_dim, 1)),
                full((output_dim, hidden_dim)),
                full((output_dim, 1)),
            ],
            out_specs=out_spec,
        ),
        compiler_params=pltpu.CompilerParams(
            dimension_semantics=("parallel",),
            vmem_limit_bytes=vmem_limit,
        ),
        cost_estimate=pl.CostEstimate(
            flops=flops,
            transcendentals=B_pad * output_dim,   # sigmoid exp (per real output element)
            bytes_accessed=bytes_accessed,
        ),
    )(xT, w1, b1, w2, b2, w3, b3)

    # Un-transpose (small: output_dim x B_pad) and drop the batch padding rows.
    return oT.T[:B, :]


def init_params(key, input_dim, hidden_dim, output_dim):
    """PyTorch-Linear-style init, f32, (in, out) weights / (1, out) biases."""
    keys = jax.random.split(key, 6)

    def linear(kw, kb, fan_in, fan_out):
        bound = 1.0 / jnp.sqrt(jnp.float32(fan_in))
        w = jax.random.uniform(kw, (fan_in, fan_out), jnp.float32, -bound, bound)
        b = jax.random.uniform(kb, (1, fan_out), jnp.float32, -bound, bound)
        return w, b

    w1, b1 = linear(keys[0], keys[1], input_dim, hidden_dim)
    w2, b2 = linear(keys[2], keys[3], hidden_dim, hidden_dim)
    w3, b3 = linear(keys[4], keys[5], hidden_dim, output_dim)
    return {"w1": w1, "b1": b1, "w2": w2, "b2": b2, "w3": w3, "b3": b3}


def prepare_kernel_params(params):
    """One-time conversion to kernel layout: transposed, bf16 matmul weights,
    f32 column biases.  Call once; reuse across forward calls."""
    return {
        "w1": params["w1"].T.astype(jnp.bfloat16),          # (hidden, in)
        "b1": params["b1"].reshape(-1, 1).astype(jnp.float32),
        "w2": params["w2"].T.astype(jnp.bfloat16),          # (hidden, hidden)
        "b2": params["b2"].reshape(-1, 1).astype(jnp.float32),
        "w3": params["w3"].T.astype(jnp.bfloat16),          # (out, hidden)
        "b3": params["b3"].reshape(-1, 1).astype(jnp.float32),
    }


def reference_forward(x, p):
    h1 = jnp.maximum(x @ p["w1"] + p["b1"], 0.0)
    h2 = jnp.maximum(h1 @ p["w2"] + p["b2"], 0.0)
    return jax.nn.sigmoid(h2 @ p["w3"] + p["b3"])


if __name__ == "__main__":
    input_dim, hidden_dim, output_dim = 16, 32, 8
    batch = 200   # deliberately ragged: exercises the 128-lane batch padding path

    key = jax.random.PRNGKey(0)
    kx, kp = jax.random.split(key)
    x = jax.random.normal(kx, (batch, input_dim), dtype=jnp.float32)
    params = init_params(kp, input_dim, hidden_dim, output_dim)
    kparams = prepare_kernel_params(params)   # one-time cast/transpose (not per call)

    out = content_enhancement_forward(x, kparams)
    out = jax.block_until_ready(out)

    ref = reference_forward(x, params)
    assert out.shape == (batch, output_dim)
    # bf16 MXU inputs (f32 accumulation) -> loosened tolerance vs f32 reference.
    err = float(jnp.max(jnp.abs(out - ref)))
    assert jnp.allclose(out, ref, atol=2e-2, rtol=2e-2), err

    print("KERNEL_OK")
</pallas_src>

<mosaic_0001>
module attributes {stable_mosaic.version = 11 : i64} {
  func.func @mlp_t_kernel(%arg0: i32, %arg1: memref<16x256xf32, #tpu.memory_space<vmem>>, %arg2: memref<32x16xbf16, #tpu.memory_space<vmem>>, %arg3: memref<32x1xf32, #tpu.memory_space<vmem>>, %arg4: memref<32x32xbf16, #tpu.memory_space<vmem>>, %arg5: memref<32x1xf32, #tpu.memory_space<vmem>>, %arg6: memref<8x32xbf16, #tpu.memory_space<vmem>>, %arg7: memref<8x1xf32, #tpu.memory_space<vmem>>, %arg8: memref<8x256xf32, #tpu.memory_space<vmem>>) attributes {dimension_semantics = [#tpu.dimension_semantics<parallel>], iteration_bounds = array<i64: 1>, scalar_prefetch = 0 : i64, scratch_operands = 0 : i64, tpu.core_type = #tpu.core_type<tc>, window_params = [{transform_indices = @transform_0, window_bounds = array<i64: 16, 256>}, {pipeline_mode = #tpu.pipeline_mode<synchronous>, transform_indices = @transform_1, window_bounds = array<i64: 32, 16>}, {pipeline_mode = #tpu.pipeline_mode<synchronous>, transform_indices = @transform_2, window_bounds = array<i64: 32, 1>}, {pipeline_mode = #tpu.pipeline_mode<synchronous>, transform_indices = @transform_3, window_bounds = array<i64: 32, 32>}, {pipeline_mode = #tpu.pipeline_mode<synchronous>, transform_indices = @transform_4, window_bounds = array<i64: 32, 1>}, {pipeline_mode = #tpu.pipeline_mode<synchronous>, transform_indices = @transform_5, window_bounds = array<i64: 8, 32>}, {pipeline_mode = #tpu.pipeline_mode<synchronous>, transform_indices = @transform_6, window_bounds = array<i64: 8, 1>}, {transform_indices = @transform_7, window_bounds = array<i64: 8, 256>}]} {
    %c0 = arith.constant 0 : index
    %c0_0 = arith.constant 0 : index
    %0 = vector.load %arg1[%c0, %c0_0] : memref<16x256xf32, #tpu.memory_space<vmem>>, vector<16x256xf32>
    %1 = arith.truncf %0 : vector<16x256xf32> to vector<16x256xbf16>
    %c0_1 = arith.constant 0 : index
    %c0_2 = arith.constant 0 : index
    %2 = vector.load %arg2[%c0_1, %c0_2] : memref<32x16xbf16, #tpu.memory_space<vmem>>, vector<32x16xbf16>
    %cst = arith.constant dense<0.000000e+00> : vector<32x256xf32>
    %3 = tpu.matmul %2, %1, %cst {dimension_numbers = #tpu.dot_dimension_numbers<[1], [0], [0], [1], [0, 0, 1, 1], [], []>} : vector<32x16xbf16>, vector<16x256xbf16>, vector<32x256xf32> -> vector<32x256xf32>
    %c0_3 = arith.constant 0 : index
    %c0_4 = arith.constant 0 : index
    %4 = vector.load %arg3[%c0_3, %c0_4] : memref<32x1xf32, #tpu.memory_space<vmem>>, vector<32x1xf32>
    %5 = vector.broadcast %4 : vector<32x1xf32> to vector<32x256xf32>
    %6 = arith.addf %3, %5 : vector<32x256xf32>
    %cst_5 = arith.constant 0.000000e+00 : f32
    %7 = vector.broadcast %cst_5 : f32 to vector<32x256xf32>
    %8 = arith.maximumf %6, %7 : vector<32x256xf32>
    %9 = arith.truncf %8 : vector<32x256xf32> to vector<32x256xbf16>
    %c0_6 = arith.constant 0 : index
    %c0_7 = arith.constant 0 : index
    %10 = vector.load %arg4[%c0_6, %c0_7] : memref<32x32xbf16, #tpu.memory_space<vmem>>, vector<32x32xbf16>
    %cst_8 = arith.constant dense<0.000000e+00> : vector<32x256xf32>
    %11 = tpu.matmul %10, %9, %cst_8 {dimension_numbers = #tpu.dot_dimension_numbers<[1], [0], [0], [1], [0, 0, 1, 1], [], []>} : vector<32x32xbf16>, vector<32x256xbf16>, vector<32x256xf32> -> vector<32x256xf32>
    %c0_9 = arith.constant 0 : index
    %c0_10 = arith.constant 0 : index
    %12 = vector.load %arg5[%c0_9, %c0_10] : memref<32x1xf32, #tpu.memory_space<vmem>>, vector<32x1xf32>
    %13 = vector.broadcast %12 : vector<32x1xf32> to vector<32x256xf32>
    %14 = arith.addf %11, %13 : vector<32x256xf32>
    %cst_11 = arith.constant 0.000000e+00 : f32
    %15 = vector.broadcast %cst_11 : f32 to vector<32x256xf32>
    %16 = arith.maximumf %14, %15 : vector<32x256xf32>
    %17 = arith.truncf %16 : vector<32x256xf32> to vector<32x256xbf16>
    %c0_12 = arith.constant 0 : index
    %c0_13 = arith.constant 0 : index
    %18 = vector.load %arg6[%c0_12, %c0_13] : memref<8x32xbf16, #tpu.memory_space<vmem>>, vector<8x32xbf16>
    %cst_14 = arith.constant dense<0.000000e+00> : vector<8x256xf32>
    %19 = tpu.matmul %18, %17, %cst_14 {dimension_numbers = #tpu.dot_dimension_numbers<[1], [0], [0], [1], [0, 0, 1, 1], [], []>} : vector<8x32xbf16>, vector<32x256xbf16>, vector<8x256xf32> -> vector<8x256xf32>
    %c0_15 = arith.constant 0 : index
    %c0_16 = arith.constant 0 : index
    %20 = vector.load %arg7[%c0_15, %c0_16] : memref<8x1xf32, #tpu.memory_space<vmem>>, vector<8x1xf32>
    %21 = vector.broadcast %20 : vector<8x1xf32> to vector<8x256xf32>
    %22 = arith.addf %19, %21 : vector<8x256xf32>
    %23 = arith.negf %22 : vector<8x256xf32>
    %24 = math.exp %23 : vector<8x256xf32>
    %cst_17 = arith.constant 1.000000e+00 : f32
    %25 = vector.broadcast %cst_17 : f32 to vector<8x256xf32>
    %26 = arith.addf %25, %24 : vector<8x256xf32>
    %27 = arith.divf %25, %26 : vector<8x256xf32>
    %c0_18 = arith.constant 0 : index
    %c0_19 = arith.constant 0 : index
    %28 = vector.load %arg8[%c0_18, %c0_19] : memref<8x256xf32, #tpu.memory_space<vmem>>, vector<8x256xf32>
    tpu.vector_store %arg8[%c0_18, %c0_19], %27 {strides = array<i32>} : memref<8x256xf32, #tpu.memory_space<vmem>>, vector<8x256xf32>,
    return
  }
  func.func @transform_0(%arg0: i32) -> (i32, i32) {
    %c0_i32 = arith.constant 0 : i32
    %c0_i32_0 = arith.constant 0 : i32
    return %c0_i32, %arg0 : i32, i32
  }
  func.func @transform_1(%arg0: i32) -> (i32, i32) {
    %c0_i32 = arith.constant 0 : i32
    %c0_i32_0 = arith.constant 0 : i32
    %c0_i32_1 = arith.constant 0 : i32
    return %c0_i32, %c0_i32_0 : i32, i32
  }
  func.func @transform_2(%arg0: i32) -> (i32, i32) {
    %c0_i32 = arith.constant 0 : i32
    %c0_i32_0 = arith.constant 0 : i32
    %c0_i32_1 = arith.constant 0 : i32
    return %c0_i32, %c0_i32_0 : i32, i32
  }
  func.func @transform_3(%arg0: i32) -> (i32, i32) {
    %c0_i32 = arith.constant 0 : i32
    %c0_i32_0 = arith.constant 0 : i32
    %c0_i32_1 = arith.constant 0 : i32
    return %c0_i32, %c0_i32_0 : i32, i32
  }
  func.func @transform_4(%arg0: i32) -> (i32, i32) {
    %c0_i32 = arith.constant 0 : i32
    %c0_i32_0 = arith.constant 0 : i32
    %c0_i32_1 = arith.constant 0 : i32
    return %c0_i32, %c0_i32_0 : i32, i32
  }
  func.func @transform_5(%arg0: i32) -> (i32, i32) {
    %c0_i32 = arith.constant 0 : i32
    %c0_i32_0 = arith.constant 0 : i32
    %c0_i32_1 = arith.constant 0 : i32
    return %c0_i32, %c0_i32_0 : i32, i32
  }
  func.func @transform_6(%arg0: i32) -> (i32, i32) {
    %c0_i32 = arith.constant 0 : i32
    %c0_i32_0 = arith.constant 0 : i32
    %c0_i32_1 = arith.constant 0 : i32
    return %c0_i32, %c0_i32_0 : i32, i32
  }
  func.func @transform_7(%arg0: i32) -> (i32, i32) {
    %c0_i32 = arith.constant 0 : i32
    %c0_i32_0 = arith.constant 0 : i32
    return %c0_i32, %arg0 : i32, i32
  }
}

</mosaic_0001>

<llo_original>
// kernel: content_enhancement_forward.1
$region0: #{content_enhancement_forward.1}
  #allocation0 [shape = 'u32[]', space=smem, size = 0x4, offset = 0x4, fixed_abs, tag = 'smem constant byte address 0x4 - core index']
  #allocation1 [shape = 'u32[144,128]{1,0:T(1,128)}', space=vmem, size = 0x12000, scoped, tag = 'internal scratch']
  %s0 = inlined_call_operand.vmem [shape: f32[16,256], index: 0, kind: input, shape index: {}]
  %s1 = inlined_call_operand.vmem [shape: bf16[32,16], index: 1, kind: input, shape index: {}]
  %s2 = inlined_call_operand.vmem [shape: f32[32,1], index: 2, kind: input, shape index: {}]
  %s3 = inlined_call_operand.vmem [shape: bf16[32,32], index: 3, kind: input, shape index: {}]
  %s4 = inlined_call_operand.vmem [shape: f32[32,1], index: 4, kind: input, shape index: {}]
  %s5 = inlined_call_operand.vmem [shape: bf16[8,32], index: 5, kind: input, shape index: {}]
  %s6 = inlined_call_operand.vmem [shape: f32[8,1], index: 6, kind: input, shape index: {}]
  %s7 = inlined_call_operand.hbm [shape: f32[8,256], index: 7, kind: output, shape index: {}]
  %s8 = sld [smem:[#allocation0]]
  $region38: #{content_enhancement_forward.1} parent=0
    _
  %s10 = ssub.s32 1, %s8
  %s11 = scalar_select 0, %s10, %s8
  $region1: #{content_enhancement_forward.1} parent=0
    #allocation2 [shape = 'u8[8192]{0}', space=vmem, size = 0x2000, scoped, tag = 'output window, operand 0, single buffered']
    #allocation3 [shape = 's32[1]{0}', space=sflag, size = 0x4, scoped, tag = 'scoped memory for content_enhancement_forward.1']
    %12 = vsyncpa [#allocation3], 0
    // Predicated region
    $region2: #{content_enhancement_forward.1} parent=1 // pred_check
      _
    $region3: #{content_enhancement_forward.1} parent=1 // pred_check_branch
      %14 = sbr.rel (0) target = $region5
    $region4: #{content_enhancement_forward.1} parent=1 // pred_region
      _
    $region5: #{content_enhancement_forward.1} parent=1 // pred_fallthru
      _
    // Predicated region
    $region6: #{content_enhancement_forward.1} parent=1 // pred_check
      _
    $region7: #{content_enhancement_forward.1} parent=1 // pred_check_branch
      %16 = sbr.rel (0) target = $region9
    $region8: #{content_enhancement_forward.1} parent=1 // pred_region
      _
    $region9: #{content_enhancement_forward.1} parent=1 // pred_fallthru
      _
    // Predicated region
    $region10: #{content_enhancement_forward.1} parent=1 // pred_check
      _
    $region11: #{content_enhancement_forward.1} parent=1 // pred_check_branch
      %18 = sbr.rel (0) target = $region13
    $region12: #{content_enhancement_forward.1} parent=1 // pred_region
      _
    $region13: #{content_enhancement_forward.1} parent=1 // pred_fallthru
      _
    // Predicated region
    $region14: #{content_enhancement_forward.1} parent=1 // pred_check
      _
    $region15: #{content_enhancement_forward.1} parent=1 // pred_check_branch
      %20 = sbr.rel (0) target = $region17
    $region16: #{content_enhancement_forward.1} parent=1 // pred_region
      _
    $region17: #{content_enhancement_forward.1} parent=1 // pred_fallthru
      _
    // Predicated region
    $region18: #{content_enhancement_forward.1} parent=1 // pred_check
      _
    $region19: #{content_enhancement_forward.1} parent=1 // pred_check_branch
      %22 = sbr.rel (0) target = $region21
    $region20: #{content_enhancement_forward.1} parent=1 // pred_region
      _
    $region21: #{content_enhancement_forward.1} parent=1 // pred_fallthru
      _
    // Predicated region
    $region22: #{content_enhancement_forward.1} parent=1 // pred_check
      _
    $region23: #{content_enhancement_forward.1} parent=1 // pred_check_branch
      %24 = sbr.rel (0) target = $region25
    $region24: #{content_enhancement_forward.1} parent=1 // pred_region
      _
    $region25: #{content_enhancement_forward.1} parent=1 // pred_fallthru
      _
    // Predicated region
    $region26: #{content_enhancement_forward.1} parent=1 // pred_check
      _
    $region27: #{content_enhancement_forward.1} parent=1 // pred_check_branch
      %26 = sbr.rel (0) target = $region29
    $region28: #{content_enhancement_forward.1} parent=1 // pred_region
      _
    $region29: #{content_enhancement_forward.1} parent=1 // pred_fallthru
      _
    %v28 = vld [vmem:[%s0] sm:$0xff]
    %v29 = vld [vmem:[%s0 + $0x8] sm:$0xff]
    %v30 = vld [vmem:[%s0 + $0x10] sm:$0xff]
    %v31 = vld [vmem:[%s0 + $0x18] sm:$0xff]
    %v32 = vpack.c.bf16 %v30, %v28
    %v33 = vpack.c.bf16 %v31, %v29
    %v34 = vld [vmem:[%s1] sm:$0xf]
    %v35 = vld [vmem:[%s1 + $0x4] sm:$0xf]
    %v36 = vld [vmem:[%s1 + $0x8] sm:$0xf]
    %v37 = vld [vmem:[%s1 + $0xc] sm:$0xf]
    %v38 = vld [vmem:[%s2] sm:$0xff]
    %v39 = vld [vmem:[%s2 + $0x8] sm:$0xff]
    %v40 = vld [vmem:[%s2 + $0x10] sm:$0xff]
    %v41 = vld [vmem:[%s2 + $0x18] sm:$0xff]
    %43 = vset.pattern.permute.xlu0 0
    %44 = vperm.xlu0 %43, %v38
    %v45 = vpop.permute.xlu0 %44
    %48 = vset.pattern.permute.xlu0 0
    %49 = vperm.xlu0 %48, %v39
    %v50 = vpop.permute.xlu0 %49
    %53 = vset.pattern.permute.xlu0 0
    %54 = vperm.xlu0 %53, %v40
    %v55 = vpop.permute.xlu0 %54
    %58 = vset.pattern.permute.xlu0 0
    %59 = vperm.xlu0 %58, %v41
    %v60 = vpop.permute.xlu0 %59
    %v66 = vunpack.c.l.b16 %v34
    %v67 = vunpack.c.l.b16 %v35
    %v68 = vunpack.c.l.b16 %v36
    %v69 = vunpack.c.l.b16 %v37
    %v70 = vpack.c.b16 %v67, %v66
    %v71 = vpack.c.b16 %v69, %v68
    %vm72 = vcmask 130048
    %v74 = vsel %vm72, %v70, 0
    %v77 = vsel %vm72, %v71, 0
    %79 = vmatprep.subr.bf16.mxu0 0
    %80 = vmatpush1.bf16.msra.mxu0 0
    %81 = vmatprep.subr.bf16.mxu0 0
    %82 = vmatpush1.bf16.msra.mxu0 0
    %83 = vmatprep.subr.bf16.mxu0 0
    %84 = vmatpush1.bf16.msra.mxu0 0
    %85 = vmatprep.subr.bf16.mxu0 0
    %86 = vmatpush1.bf16.msra.mxu0 0
    %87 = vmatprep.subr.bf16.mxu0 0
    %88 = vmatpush1.bf16.msra.mxu0 0
    %89 = vmatprep.subr.bf16.mxu0 0
    %90 = vmatpush1.bf16.msra.mxu0 0
    %91 = vmatprep.subr.bf16.mxu0 0
    %92 = vmatpush1.bf16.msra.mxu0 0
    %93 = vmatprep.subr.bf16.mxu0 %v33
    %94 = vmatpush1.bf16.msra.mxu0 %v32
    %95 = vmatprep.subr.bf16.mxu0 0
    %96 = vmatpush2.bf16.msra.mxu0 0
    %97 = vmatprep.subr.bf16.mxu0 0
    %98 = vmatpush2.bf16.msra.mxu0 0
    %99 = vmatprep.subr.bf16.mxu0 0
    %100 = vmatpush2.bf16.msra.mxu0 0
    %101 = vmatprep.subr.bf16.mxu0 0
    %102 = vmatpush2.bf16.msra.mxu0 0
    %103 = vmatprep.subr.bf16.mxu0 0
    %104 = vmatpush2.bf16.msra.mxu0 0
    %105 = vmatprep.subr.bf16.mxu0 0
    %106 = vmatpush2.bf16.msra.mxu0 0
    %107 = vmatprep.subr.bf16.mxu0 0
    %108 = vmatpush2.bf16.msra.mxu0 0
    %109 = vmatprep.subr.bf16.mxu0 0
    %110 = vmatpush2.bf16.msra.mxu0 0
    %111 = vmatprep.mubr.bf16.mxu0 0
    %112 = vmatmul.mubr.bf16.gmra.mxu0 %v74
    %v113 = vpop.f32.mrf.mxu0
    %v114 = vadd.f32 %v45, %v113
    %v115 = vpop.f32.mrf.mxu0
    %v116 = vadd.f32 %v45, %v115
    %v117 = vpop.f32.mrf.mxu0
    %v118 = vadd.f32 %v50, %v117
    %v119 = vpop.f32.mrf.mxu0
    %v120 = vadd.f32 %v50, %v119
    %121 = vmatprep.mubr.bf16.mxu0 0
    %122 = vmatmul.mubr.bf16.gmra.mxu0 %v77
    %v123 = vpop.f32.mrf.mxu0
    %v124 = vadd.f32 %v55, %v123
    %v125 = vpop.f32.mrf.mxu0
    %v126 = vadd.f32 %v55, %v125
    %v127 = vpop.f32.mrf.mxu0
    %v128 = vadd.f32 %v60, %v127
    %v129 = vpop.f32.mrf.mxu0
    %v130 = vadd.f32 %v60, %v129
    %131 = vdwg.mxu0
    %v132 = vmax.f32 %v114, 0.0
    %v133 = vmax.f32 %v116, 0.0
    %v134 = vmax.f32 %v118, 0.0
    %v135 = vmax.f32 %v120, 0.0
    %v136 = vmax.f32 %v124, 0.0
    %v137 = vmax.f32 %v126, 0.0
    %v138 = vmax.f32 %v128, 0.0
    %v139 = vmax.f32 %v130, 0.0
    %v140 = vpack.c.bf16 %v134, %v132
    %v141 = vpack.c.bf16 %v135, %v133
    %v142 = vpack.c.bf16 %v138, %v136
    %v143 = vpack.c.bf16 %v139, %v137
    %v144 = vld [vmem:[%s3] sm:$0xf]
    %v145 = vld [vmem:[%s3 + $0x4] sm:$0xf]
    %v146 = vld [vmem:[%s3 + $0x8] sm:$0xf]
    %v147 = vld [vmem:[%s3 + $0xc] sm:$0xf]
    %v148 = vld [vmem:[%s4] sm:$0xff]
    %v149 = vld [vmem:[%s4 + $0x8] sm:$0xff]
    %v150 = vld [vmem:[%s4 + $0x10] sm:$0xff]
    %v151 = vld [vmem:[%s4 + $0x18] sm:$0xff]
    %153 = vset.pattern.permute.xlu0 0
    %154 = vperm.xlu0 %153, %v148
    %v155 = vpop.permute.xlu0 %154
    %158 = vset.pattern.permute.xlu0 0
    %159 = vperm.xlu0 %158, %v149
    %v160 = vpop.permute.xlu0 %159
    %163 = vset.pattern.permute.xlu0 0
    %164 = vperm.xlu0 %163, %v150
    %v165 = vpop.permute.xlu0 %164
    %168 = vset.pattern.permute.xlu0 0
    %169 = vperm.xlu0 %168, %v151
    %v170 = vpop.permute.xlu0 %169
    %v176 = vunpack.c.l.b16 %v144
    %v177 = vunpack.c.l.b16 %v145
    %v178 = vunpack.c.l.b16 %v146
    %v179 = vunpack.c.l.b16 %v147
    %v180 = vpack.c.b16 %v177, %v176
    %v181 = vpack.c.b16 %v179, %v178
    %vm182 = vcmask 261120
    %v184 = vsel %vm182, %v180, 0
    %v187 = vsel %vm182, %v181, 0
    %189 = vmatprep.subr.bf16.mxu0 0
    %190 = vmatpush1.bf16.msra.mxu0 0
    %191 = vmatprep.subr.bf16.mxu0 0
    %192 = vmatpush1.bf16.msra.mxu0 0
    %193 = vmatprep.subr.bf16.mxu0 0
    %194 = vmatpush1.bf16.msra.mxu0 0
    %195 = vmatprep.subr.bf16.mxu0 0
    %196 = vmatpush1.bf16.msra.mxu0 0
    %197 = vmatprep.subr.bf16.mxu0 0
    %198 = vmatpush1.bf16.msra.mxu0 0
    %199 = vmatprep.subr.bf16.mxu0 0
    %200 = vmatpush1.bf16.msra.mxu0 0
    %201 = vmatprep.subr.bf16.mxu0 %v143
    %202 = vmatpush1.bf16.msra.mxu0 %v142
    %203 = vmatprep.subr.bf16.mxu0 %v141
    %204 = vmatpush1.bf16.msra.mxu0 %v140
    %205 = vmatprep.subr.bf16.mxu0 0
    %206 = vmatpush2.bf16.msra.mxu0 0
    %207 = vmatprep.subr.bf16.mxu0 0
    %208 = vmatpush2.bf16.msra.mxu0 0
    %209 = vmatprep.subr.bf16.mxu0 0
    %210 = vmatpush2.bf16.msra.mxu0 0
    %211 = vmatprep.subr.bf16.mxu0 0
    %212 = vmatpush2.bf16.msra.mxu0 0
    %213 = vmatprep.subr.bf16.mxu0 0
    %214 = vmatpush2.bf16.msra.mxu0 0
    %215 = vmatprep.subr.bf16.mxu0 0
    %216 = vmatpush2.bf16.msra.mxu0 0
    %217 = vmatprep.subr.bf16.mxu0 0
    %218 = vmatpush2.bf16.msra.mxu0 0
    %219 = vmatprep.subr.bf16.mxu0 0
    %220 = vmatpush2.bf16.msra.mxu0 0
    %221 = vmatprep.mubr.bf16.mxu0 0
    %222 = vmatmul.mubr.bf16.gmra.mxu0 %v184
    %v223 = vpop.f32.mrf.mxu0
    %v224 = vadd.f32 %v155, %v223
    %v225 = vpop.f32.mrf.mxu0
    %v226 = vadd.f32 %v155, %v225
    %v227 = vpop.f32.mrf.mxu0
    %v228 = vadd.f32 %v160, %v227
    %v229 = vpop.f32.mrf.mxu0
    %v230 = vadd.f32 %v160, %v229
    %231 = vmatprep.mubr.bf16.mxu0 0
    %232 = vmatmul.mubr.bf16.gmra.mxu0 %v187
    %v233 = vpop.f32.mrf.mxu0
    %v234 = vadd.f32 %v165, %v233
    %v235 = vpop.f32.mrf.mxu0
    %v236 = vadd.f32 %v165, %v235
    %v237 = vpop.f32.mrf.mxu0
    %v238 = vadd.f32 %v170, %v237
    %v239 = vpop.f32.mrf.mxu0
    %v240 = vadd.f32 %v170, %v239
    %241 = vdwg.mxu0
    %v242 = vmax.f32 %v224, 0.0
    %v243 = vmax.f32 %v226, 0.0
    %v244 = vmax.f32 %v228, 0.0
    %v245 = vmax.f32 %v230, 0.0
    %v246 = vmax.f32 %v234, 0.0
    %v247 = vmax.f32 %v236, 0.0
    %v248 = vmax.f32 %v238, 0.0
    %v249 = vmax.f32 %v240, 0.0
    %v250 = vpack.c.bf16 %v244, %v242
    %v251 = vpack.c.bf16 %v245, %v243
    %v252 = vpack.c.bf16 %v248, %v246
    %v253 = vpack.c.bf16 %v249, %v247
    %v254 = vld [vmem:[%s5] sm:$0xf]
    %v255 = vld [vmem:[%s6] sm:$0xff]
    %257 = vset.pattern.permute.xlu0 0
    %258 = vperm.xlu0 %257, %v255
    %v259 = vpop.permute.xlu0 %258
    %v262 = vsel %vm182, %v254, 0
    %264 = vmatprep.subr.bf16.mxu0 0
    %265 = vmatpush1.bf16.msra.mxu0 0
    %266 = vmatprep.subr.bf16.mxu0 0
    %267 = vmatpush1.bf16.msra.mxu0 0
    %268 = vmatprep.subr.bf16.mxu0 0
    %269 = vmatpush1.bf16.msra.mxu0 0
    %270 = vmatprep.subr.bf16.mxu0 0
    %271 = vmatpush1.bf16.msra.mxu0 0
    %272 = vmatprep.subr.bf16.mxu0 0
    %273 = vmatpush1.bf16.msra.mxu0 0
    %274 = vmatprep.subr.bf16.mxu0 0
    %275 = vmatpush1.bf16.msra.mxu0 0
    %276 = vmatprep.subr.bf16.mxu0 %v253
    %277 = vmatpush1.bf16.msra.mxu0 %v252
    %278 = vmatprep.subr.bf16.mxu0 %v251
    %279 = vmatpush1.bf16.msra.mxu0 %v250
    %280 = vmatprep.subr.bf16.mxu0 0
    %281 = vmatpush2.bf16.msra.mxu0 0
    %282 = vmatprep.subr.bf16.mxu0 0
    %283 = vmatpush2.bf16.msra.mxu0 0
    %284 = vmatprep.subr.bf16.mxu0 0
    %285 = vmatpush2.bf16.msra.mxu0 0
    %286 = vmatprep.subr.bf16.mxu0 0
    %287 = vmatpush2.bf16.msra.mxu0 0
    %288 = vmatprep.subr.bf16.mxu0 0
    %289 = vmatpush2.bf16.msra.mxu0 0
    %290 = vmatprep.subr.bf16.mxu0 0
    %291 = vmatpush2.bf16.msra.mxu0 0
    %292 = vmatprep.subr.bf16.mxu0 0
    %293 = vmatpush2.bf16.msra.mxu0 0
    %294 = vmatprep.subr.bf16.mxu0 0
    %295 = vmatpush2.bf16.msra.mxu0 0
    %296 = vmatprep.mubr.bf16.mxu0 0
    %297 = vmatmul.mubr.bf16.gmra.mxu0 %v262
    %v298 = vpop.f32.mrf.mxu0
    %v299 = vadd.f32 %v259, %v298
    %v300 = vpop.f32.mrf.mxu0
    %v301 = vadd.f32 %v259, %v300
    %v302 = vpop.f32.mrf.mxu0
    %v303 = vpop.f32.mrf.mxu0
    %304 = vdwg.mxu0
    %v305 = vxor.u32 %v299, 2147483648
    %v306 = vxor.u32 %v301, 2147483648
    %v307 = vmul.f32 %v305, 1.442695
    %v308 = vpow.pop %v307
    %v309 = vmul.f32 %v306, 1.442695
    %v310 = vpow.pop %v309
    %v311 = vadd.f32 %v308, 1.0
    %v312 = vadd.f32 %v310, 1.0
    %v313 = vrcp.pop %v311
    %v314 = vmul.f32 1.0, %v313
    %v315 = vrcp.pop %v312
    %v316 = vmul.f32 1.0, %v315
    %317 = vst [vmem:[#allocation2] sm:$0xff] %v314
    %318 = vst [vmem:[#allocation2 + $0x8] sm:$0xff] %v316
    // Predicated region
    $region30: #{content_enhancement_forward.1} parent=1 // pred_check
      _
    $region31: #{content_enhancement_forward.1} parent=1 // pred_check_branch
      %320 = sbr.rel (0) target = $region33
    $region32: #{content_enhancement_forward.1} parent=1 // pred_region
      %s322 = ssub.s32 256, 256
      %323 = vsyncadd [#allocation3], %s322
      %s325 = sshll.u32 [#allocation2], 4
      %s326 = int_to_ptr.vmem [resolvable:$true] %s325
      %328 = dma.vmem_to_hbm [thread:$0]  %s326, 256, %s7, [#allocation3]
    $region33: #{content_enhancement_forward.1} parent=1 // pred_fallthru
      _
    // Predicated region
    $region34: #{content_enhancement_forward.1} parent=1 // pred_check
      _
    $region35: #{content_enhancement_forward.1} parent=1 // pred_check_branch
      %330 = sbr.rel (0) target = $region37
    $region36: #{content_enhancement_forward.1} parent=1 // pred_region
      %331 = dma.done [#allocation3], 256
    $region37: #{content_enhancement_forward.1} parent=1 // pred_fallthru
      _
    %332 = vsyncpa [#allocation3], 1

</llo_original>
